<compile_context>
chip_gen: v7x
topology: tpu7x:2x2x1
jax: 0.10.0
libtpu: 0.0.40
codegen_flags: <defaults>
</compile_context>

<pallas_src>
import math
from functools import partial

import jax
import jax.numpy as jnp
from jax import lax
from jax.experimental import pallas as pl
from jax.experimental.pallas import tpu as pltpu

LANES = 128


def _round_up(x, m):
    return (x + m - 1) // m * m


# ------------------------------ fused kernel -------------------------------

def _kp_kernel(wp_ref, ws_ref, o_ref, col_ref, *, B, k, wpc, m_rows, cw,
               H, W, pad, K_conv, K_tot, m_conv, m_tot):
    # wp_ref  (B, r_rows, cw)  f32  reflect-padded style slab, row = y*Wp + x
    # ws_ref  (K_tot, n_pad)   f32  fused weight slab [spatial | pointwise | bias]
    # o_ref   (m_tot, n_pad)   f32  fused GEMM output (lane-dense, 128 lanes)
    # col_ref (m_tot, K_tot)   f32  im2col scratch (VMEM)

    # Zero-fill the scratch once: covers the zero K-tail of the pooled rows and
    # the M padding rows (their outputs are sliced off in the wrapper).
    col_ref[...] = jnp.zeros((m_tot, K_tot), jnp.float32)

    # Bias lane: column K_conv is constant 1.0 for every row, so the GEMM adds
    # the biases that pack_params placed on weight row K_conv (bias fold).
    nb = K_tot - K_conv
    col_ref[:, K_conv:K_tot] = (
        lax.broadcasted_iota(jnp.int32, (m_tot, nb), 1) == 0
    ).astype(jnp.float32)

    # Conv taps: flattened-shift im2col.  Output row r = y*Wp + x reads input
    # row r + ky*Wp + kx for tap (ky, kx) — a contiguous row window, so each
    # tap is a static VMEM->VMEM row-window copy (no k^2 HBM blow-up, no
    # in-kernel reshapes).
    for b in range(B):
        base = b * m_rows
        for ky in range(k):
            for kx in range(k):
                t = ky * k + kx
                shift = ky * wpc + kx
                col_ref[base:base + m_rows, t * cw:(t + 1) * cw] = \
                    wp_ref[b, shift:shift + m_rows, :]

    # Pooled rows: spatial mean over the interior (original, unpadded) rows of
    # the already-resident slab -> one extra im2col row per batch whose first
    # cw columns hold the pooled style vector (channels stay in lanes, so no
    # transpose is needed and the pooled 1x1 convs ride the same GEMM).
    inv_hw = 1.0 / (H * W)
    for b in range(B):
        s = jnp.zeros((1, cw), jnp.float32)
        for y in range(H):
            r0 = (y + pad) * wpc + pad
            s = s + jnp.sum(wp_ref[b, r0:r0 + W, :], axis=0, keepdims=True)
        col_ref[m_conv + b:m_conv + b + 1, :cw] = s * inv_hw

    # One f32 MXU GEMM computes the spatial conv, the pooled 1x1 convs and all
    # three biases at once (K = k*k*cw + bias lane, N padded to 128 lanes ->
    # unmasked vst, full MXU column utilisation).
    o_ref[...] = jnp.dot(col_ref[...], ws_ref[...],
                         preferred_element_type=jnp.float32)


# ------------------------- one-time parameter repack ------------------------

def pack_params(params, *, in_channels, out_channels, n_groups, w_channels,
                kernel_size):
    """One-time repack of the module parameters into the fused GEMM weight slab.

    K axis:  row t*cw + c  -> spatial tap t = ky*k + kx, style channel c;
             row K_conv    -> all biases (paired with the in-kernel ones lane);
             remaining rows are zero padding.
    N axis:  [0, c_sp) spatial conv outputs, [c_sp, c_sp+c_pw) pointwise
             outputs, [c_sp+c_pw, n_valid) bias outputs, rest zero padding.
    """
    k, cw, oc = kernel_size, w_channels, out_channels
    c_sp = in_channels * out_channels // n_groups
    c_pw = out_channels * out_channels // n_groups
    n_valid = c_sp + c_pw + oc
    n_pad = _round_up(n_valid, LANES)
    K_conv = k * k * cw
    K_tot = _round_up(K_conv + 1, 8)

    slab = jnp.zeros((K_tot, n_pad), jnp.float32)
    sw = params["spatial_w"].transpose(2, 3, 1, 0).reshape(K_conv, c_sp)
    slab = slab.at[:K_conv, :c_sp].set(sw.astype(jnp.float32))
    slab = slab.at[:cw, c_sp:c_sp + c_pw].set(
        params["pointwise_w"].reshape(c_pw, cw).T.astype(jnp.float32))
    slab = slab.at[:cw, c_sp + c_pw:n_valid].set(
        params["bias_w"].reshape(oc, cw).T.astype(jnp.float32))
    slab = slab.at[K_conv, :c_sp].set(params["spatial_b"])
    slab = slab.at[K_conv, c_sp:c_sp + c_pw].set(params["pointwise_b"])
    slab = slab.at[K_conv, c_sp + c_pw:n_valid].set(params["bias_b"])
    return slab


# ------------------------------ forward pass -------------------------------

@partial(jax.jit, static_argnames=("in_channels", "out_channels", "n_groups",
                                   "kernel_size"))
def kernel_predictor_forward(w_slab, w, *, in_channels, out_channels, n_groups,
                             kernel_size):
    B, cw, H, W = w.shape
    k = kernel_size
    pad = math.ceil((k - 1) / 2)
    hp, wpc = H + 2 * pad, W + 2 * pad                 # padded spatial size
    hout, wout = hp - (k - 1), wpc - (k - 1)           # conv output size
    # PyTorch's reshape requires the conv output to have exactly k*k spatial
    # positions (AdaConv pre-pools the style map to kernel_size).
    assert hout * wout == k * k, (
        "KernelPredictor requires the style-map spatial size such that the "
        "spatial conv output has exactly kernel_size**2 positions")

    c_sp = in_channels * out_channels // n_groups
    c_pw = out_channels * out_channels // n_groups
    oc = out_channels
    n_valid = c_sp + c_pw + oc
    n_pad = _round_up(n_valid, LANES)
    K_conv = k * k * cw
    K_tot = _round_up(K_conv + 1, 8)
    assert w_slab.shape == (K_tot, n_pad), "w_slab was packed for another config"

    m_rows = _round_up(hout * wpc, 8)                  # conv output rows / batch
    r_rows = _round_up((k - 1) * (wpc + 1) + m_rows, 8)  # input rows / batch
    m_conv = B * m_rows
    m_tot = _round_up(m_conv + B, 8)                   # + one pooled row / batch

    # Thin XLA glue (fused inside this jit): reflect pad + NHWC flatten.
    wpad = jnp.pad(w, ((0, 0), (0, 0), (pad, pad), (pad, pad)), mode="reflect")
    wp_flat = wpad.transpose(0, 2, 3, 1).reshape(B, hp * wpc, cw)
    wp_flat = jnp.pad(wp_flat, ((0, 0), (0, r_rows - hp * wpc), (0, 0)))
    wp_flat = wp_flat.astype(jnp.float32)

    kern = partial(_kp_kernel, B=B, k=k, wpc=wpc, m_rows=m_rows, cw=cw, H=H,
                   W=W, pad=pad, K_conv=K_conv, K_tot=K_tot, m_conv=m_conv,
                   m_tot=m_tot)

    flops = 2 * m_tot * K_tot * n_pad
    bytes_accessed = 4 * (B * r_rows * cw + K_tot * n_pad + m_tot * n_pad)

    o = pl.pallas_call(
        kern,
        out_shape=jax.ShapeDtypeStruct((m_tot, n_pad), jnp.float32),
        in_specs=[pl.BlockSpec(memory_space=pltpu.MemorySpace.VMEM),   # style slab
                  pl.BlockSpec(memory_space=pltpu.MemorySpace.VMEM)],  # weight slab
        out_specs=pl.BlockSpec(memory_space=pltpu.MemorySpace.VMEM),
        scratch_shapes=[pltpu.VMEM((m_tot, K_tot), jnp.float32)],
        cost_estimate=pl.CostEstimate(flops=flops, transcendentals=0,
                                      bytes_accessed=bytes_accessed),
        # Single grid step: total VMEM residency is a few tens of KiB, far
        # below the 32 MiB default scoped limit on every generation.  For
        # large B, switch to grid=(num_batch_blocks,) with
        # dimension_semantics=("parallel",) so v7x's two TCs split batches.
    )(wp_flat, w_slab)

    # Unpack (tiny slices / reshapes, fused by the surrounding jit).
    sp = o[:m_conv, :c_sp].reshape(B, m_rows, c_sp)[:, :hout * wpc, :]
    sp = sp.reshape(B, hout, wpc, c_sp)[:, :, :wout, :].transpose(0, 3, 1, 2)
    w_spatial = sp.reshape(B, out_channels, in_channels // n_groups, k, k)

    pooled_out = o[m_conv:m_conv + B, c_sp:n_valid]
    w_pointwise = pooled_out[:, :c_pw].reshape(
        B, out_channels, out_channels // n_groups, 1, 1)
    bias = pooled_out[:, c_pw:]
    return w_spatial, w_pointwise, bias


# ----------------------------- parameter init ------------------------------

def init_params(key, in_channels, out_channels, n_groups, w_channels, kernel_size):
    c_sp = in_channels * out_channels // n_groups
    c_pw = out_channels * out_channels // n_groups
    k = kernel_size
    keys = jax.random.split(key, 6)

    def uinit(k_, shape, fan_in):
        bound = 1.0 / math.sqrt(fan_in)
        return jax.random.uniform(k_, shape, jnp.float32, -bound, bound)

    return {
        "spatial_w": uinit(keys[0], (c_sp, w_channels, k, k), w_channels * k * k),
        "spatial_b": uinit(keys[1], (c_sp,), w_channels * k * k),
        "pointwise_w": uinit(keys[2], (c_pw, w_channels, 1, 1), w_channels),
        "pointwise_b": uinit(keys[3], (c_pw,), w_channels),
        "bias_w": uinit(keys[4], (out_channels, w_channels, 1, 1), w_channels),
        "bias_b": uinit(keys[5], (out_channels,), w_channels),
    }


# ------------------------- pure-JAX reference model ------------------------

def _reference_forward(params, w, *, in_channels, out_channels, n_groups,
                       kernel_size):
    """Exact f32 broadcast/sum reference (no XLA conv/dot precision surprises)."""
    B, cw, H, W = w.shape
    k = kernel_size
    pad = math.ceil((k - 1) / 2)
    xp = jnp.pad(w, ((0, 0), (0, 0), (pad, pad), (pad, pad)), mode="reflect")
    hout = H + 2 * pad - (k - 1)
    wout = W + 2 * pad - (k - 1)
    sw = params["spatial_w"]
    out = jnp.zeros((B, sw.shape[0], hout, wout), jnp.float32)
    for ky in range(k):
        for kx in range(k):
            patch = xp[:, :, ky:ky + hout, kx:kx + wout]          # (B,C,Ho,Wo)
            tap = sw[:, :, ky, kx]                                # (O,C)
            out = out + (patch[:, None] * tap[None, :, :, None, None]).sum(axis=2)
    out = out + params["spatial_b"][None, :, None, None]
    w_spatial = out.reshape(B, out_channels, in_channels // n_groups, k, k)

    pooled = w.mean(axis=(2, 3))                                  # (B, cw)
    c_pw = out_channels * out_channels // n_groups
    pw_w = params["pointwise_w"].reshape(c_pw, cw)
    b_w = params["bias_w"].reshape(out_channels, cw)
    w_pointwise = ((pooled[:, None, :] * pw_w[None]).sum(-1)
                   + params["pointwise_b"]).reshape(
                       B, out_channels, out_channels // n_groups, 1, 1)
    bias = (pooled[:, None, :] * b_w[None]).sum(-1) + params["bias_b"]
    return w_spatial, w_pointwise, bias


# ---------------------------------- main -----------------------------------

if __name__ == "__main__":
    in_channels, out_channels, n_groups = 8, 8, 2
    w_channels, kernel_size = 16, 3
    B = 2

    key = jax.random.PRNGKey(0)
    kp_key, kx_key = jax.random.split(key)
    params = init_params(kp_key, in_channels, out_channels, n_groups,
                         w_channels, kernel_size)

    # One-time parameter repack (cached alongside the module parameters).
    w_slab = jax.block_until_ready(pack_params(
        params, in_channels=in_channels, out_channels=out_channels,
        n_groups=n_groups, w_channels=w_channels, kernel_size=kernel_size))

    # AdaConv style map: spatial size equals kernel_size (module requirement).
    w_in = jax.random.normal(kx_key, (B, w_channels, kernel_size, kernel_size),
                             jnp.float32)

    w_spatial, w_pointwise, bias = kernel_predictor_forward(
        w_slab, w_in, in_channels=in_channels, out_channels=out_channels,
        n_groups=n_groups, kernel_size=kernel_size)
    jax.block_until_ready((w_spatial, w_pointwise, bias))

    ref = _reference_forward(params, w_in, in_channels=in_channels,
                             out_channels=out_channels, n_groups=n_groups,
                             kernel_size=kernel_size)

    assert w_spatial.shape == (B, out_channels, in_channels // n_groups,
                               kernel_size, kernel_size)
    assert w_pointwise.shape == (B, out_channels, out_channels // n_groups, 1, 1)
    assert bias.shape == (B, out_channels)

    # The kernel runs f32 end to end (f32 MXU operands + f32 accumulation);
    # observed error vs. the exact reference is ~1e-6.  The tolerance keeps
    # headroom for MXU f32 pass-count differences across TPU generations.
    assert jnp.allclose(w_spatial, ref[0], atol=2e-2, rtol=2e-2)
    assert jnp.allclose(w_pointwise, ref[1], atol=2e-2, rtol=2e-2)
    assert jnp.allclose(bias, ref[2], atol=2e-2, rtol=2e-2)

    print("KERNEL_OK")
</pallas_src>

<mosaic_0001>
module attributes {stable_mosaic.version = 11 : i64} {
  func.func @_kp_kernel(%arg0: memref<2x32x16xf32, #tpu.memory_space<vmem>>, %arg1: memref<152x128xf32, #tpu.memory_space<vmem>>, %arg2: memref<40x128xf32, #tpu.memory_space<vmem>>, %arg3: memref<40x152xf32, #tpu.memory_space<vmem>>) attributes {dimension_semantics = [], scalar_prefetch = 0 : i64, scratch_operands = 1 : i64, tpu.core_type = #tpu.core_type<tc>} {
    %cst = arith.constant 0.000000e+00 : f32
    %0 = vector.broadcast %cst : f32 to vector<40x152xf32>
    %c0 = arith.constant 0 : index
    %c0_0 = arith.constant 0 : index
    %1 = vector.load %arg3[%c0, %c0_0] : memref<40x152xf32, #tpu.memory_space<vmem>>, vector<40x152xf32>
    tpu.vector_store %arg3[%c0, %c0_0], %0 {strides = array<i32>} : memref<40x152xf32, #tpu.memory_space<vmem>>, vector<40x152xf32>,
    %2 = tpu.iota {dimensions = array<i32: 1>} : vector<40x8xi32>
    %c0_i32 = arith.constant 0 : i32
    %3 = vector.broadcast %c0_i32 : i32 to vector<40x8xi32>
    %4 = arith.cmpi eq, %2, %3 : vector<40x8xi32>
    %5 = arith.extui %4 : vector<40x8xi1> to vector<40x8xi32>
    %6 = arith.sitofp %5 : vector<40x8xi32> to vector<40x8xf32>
    %c0_1 = arith.constant 0 : index
    %c144 = arith.constant 144 : index
    %7 = vector.load %arg3[%c0_1, %c144] : memref<40x152xf32, #tpu.memory_space<vmem>>, vector<40x8xf32>
    tpu.vector_store %arg3[%c0_1, %c144], %6 {strides = array<i32>} : memref<40x152xf32, #tpu.memory_space<vmem>>, vector<40x8xf32>,
    %c0_2 = arith.constant 0 : index
    %c0_3 = arith.constant 0 : index
    %c0_4 = arith.constant 0 : index
    %8 = vector.load %arg0[%c0_2, %c0_3, %c0_4] : memref<2x32x16xf32, #tpu.memory_space<vmem>>, vector<1x16x16xf32>
    %9 = vector.shape_cast %8 : vector<1x16x16xf32> to vector<16x16xf32>
    %c0_5 = arith.constant 0 : index
    %c0_6 = arith.constant 0 : index
    %10 = vector.load %arg3[%c0_5, %c0_6] : memref<40x152xf32, #tpu.memory_space<vmem>>, vector<16x16xf32>
    tpu.vector_store %arg3[%c0_5, %c0_6], %9 {strides = array<i32>} : memref<40x152xf32, #tpu.memory_space<vmem>>, vector<16x16xf32>,
    %c0_7 = arith.constant 0 : index
    %c1 = arith.constant 1 : index
    %c0_8 = arith.constant 0 : index
    %11 = vector.load %arg0[%c0_7, %c1, %c0_8] : memref<2x32x16xf32, #tpu.memory_space<vmem>>, vector<1x16x16xf32>
    %12 = vector.shape_cast %11 : vector<1x16x16xf32> to vector<16x16xf32>
    %c0_9 = arith.constant 0 : index
    %c16 = arith.constant 16 : index
    %13 = vector.load %arg3[%c0_9, %c16] : memref<40x152xf32, #tpu.memory_space<vmem>>, vector<16x16xf32>
    tpu.vector_store %arg3[%c0_9, %c16], %12 {strides = array<i32>} : memref<40x152xf32, #tpu.memory_space<vmem>>, vector<16x16xf32>,
    %c0_10 = arith.constant 0 : index
    %c2 = arith.constant 2 : index
    %c0_11 = arith.constant 0 : index
    %14 = vector.load %arg0[%c0_10, %c2, %c0_11] : memref<2x32x16xf32, #tpu.memory_space<vmem>>, vector<1x16x16xf32>
    %15 = vector.shape_cast %14 : vector<1x16x16xf32> to vector<16x16xf32>
    %c0_12 = arith.constant 0 : index
    %c32 = arith.constant 32 : index
    %16 = vector.load %arg3[%c0_12, %c32] : memref<40x152xf32, #tpu.memory_space<vmem>>, vector<16x16xf32>
    tpu.vector_store %arg3[%c0_12, %c32], %15 {strides = array<i32>} : memref<40x152xf32, #tpu.memory_space<vmem>>, vector<16x16xf32>,
    %c0_13 = arith.constant 0 : index
    %c5 = arith.constant 5 : index
    %c0_14 = arith.constant 0 : index
    %17 = vector.load %arg0[%c0_13, %c5, %c0_14] : memref<2x32x16xf32, #tpu.memory_space<vmem>>, vector<1x16x16xf32>
    %18 = vector.shape_cast %17 : vector<1x16x16xf32> to vector<16x16xf32>
    %c0_15 = arith.constant 0 : index
    %c48 = arith.constant 48 : index
    %19 = vector.load %arg3[%c0_15, %c48] : memref<40x152xf32, #tpu.memory_space<vmem>>, vector<16x16xf32>
    tpu.vector_store %arg3[%c0_15, %c48], %18 {strides = array<i32>} : memref<40x152xf32, #tpu.memory_space<vmem>>, vector<16x16xf32>,
    %c0_16 = arith.constant 0 : index
    %c6 = arith.constant 6 : index
    %c0_17 = arith.constant 0 : index
    %20 = vector.load %arg0[%c0_16, %c6, %c0_17] : memref<2x32x16xf32, #tpu.memory_space<vmem>>, vector<1x16x16xf32>
    %21 = vector.shape_cast %20 : vector<1x16x16xf32> to vector<16x16xf32>
    %c0_18 = arith.constant 0 : index
    %c64 = arith.constant 64 : index
    %22 = vector.load %arg3[%c0_18, %c64] : memref<40x152xf32, #tpu.memory_space<vmem>>, vector<16x16xf32>
    tpu.vector_store %arg3[%c0_18, %c64], %21 {strides = array<i32>} : memref<40x152xf32, #tpu.memory_space<vmem>>, vector<16x16xf32>,
    %c0_19 = arith.constant 0 : index
    %c7 = arith.constant 7 : index
    %c0_20 = arith.constant 0 : index
    %23 = vector.load %arg0[%c0_19, %c7, %c0_20] : memref<2x32x16xf32, #tpu.memory_space<vmem>>, vector<1x16x16xf32>
    %24 = vector.shape_cast %23 : vector<1x16x16xf32> to vector<16x16xf32>
    %c0_21 = arith.constant 0 : index
    %c80 = arith.constant 80 : index
    %25 = vector.load %arg3[%c0_21, %c80] : memref<40x152xf32, #tpu.memory_space<vmem>>, vector<16x16xf32>
    tpu.vector_store %arg3[%c0_21, %c80], %24 {strides = array<i32>} : memref<40x152xf32, #tpu.memory_space<vmem>>, vector<16x16xf32>,
    %c0_22 = arith.constant 0 : index
    %c10 = arith.constant 10 : index
    %c0_23 = arith.constant 0 : index
    %26 = vector.load %arg0[%c0_22, %c10, %c0_23] : memref<2x32x16xf32, #tpu.memory_space<vmem>>, vector<1x16x16xf32>
    %27 = vector.shape_cast %26 : vector<1x16x16xf32> to vector<16x16xf32>
    %c0_24 = arith.constant 0 : index
    %c96 = arith.constant 96 : index
    %28 = vector.load %arg3[%c0_24, %c96] : memref<40x152xf32, #tpu.memory_space<vmem>>, vector<16x16xf32>
    tpu.vector_store %arg3[%c0_24, %c96], %27 {strides = array<i32>} : memref<40x152xf32, #tpu.memory_space<vmem>>, vector<16x16xf32>,
    %c0_25 = arith.constant 0 : index
    %c11 = arith.constant 11 : index
    %c0_26 = arith.constant 0 : index
    %29 = vector.load %arg0[%c0_25, %c11, %c0_26] : memref<2x32x16xf32, #tpu.memory_space<vmem>>, vector<1x16x16xf32>
    %30 = vector.shape_cast %29 : vector<1x16x16xf32> to vector<16x16xf32>
    %c0_27 = arith.constant 0 : index
    %c112 = arith.constant 112 : index
    %31 = vector.load %arg3[%c0_27, %c112] : memref<40x152xf32, #tpu.memory_space<vmem>>, vector<16x16xf32>
    tpu.vector_store %arg3[%c0_27, %c112], %30 {strides = array<i32>} : memref<40x152xf32, #tpu.memory_space<vmem>>, vector<16x16xf32>,
    %c0_28 = arith.constant 0 : index
    %c12 = arith.constant 12 : index
    %c0_29 = arith.constant 0 : index
    %32 = vector.load %arg0[%c0_28, %c12, %c0_29] : memref<2x32x16xf32, #tpu.memory_space<vmem>>, vector<1x16x16xf32>
    %33 = vector.shape_cast %32 : vector<1x16x16xf32> to vector<16x16xf32>
    %c0_30 = arith.constant 0 : index
    %c128 = arith.constant 128 : index
    %34 = vector.load %arg3[%c0_30, %c128] : memref<40x152xf32, #tpu.memory_space<vmem>>, vector<16x16xf32>
    tpu.vector_store %arg3[%c0_30, %c128], %33 {strides = array<i32>} : memref<40x152xf32, #tpu.memory_space<vmem>>, vector<16x16xf32>,
    %c1_31 = arith.constant 1 : index
    %c0_32 = arith.constant 0 : index
    %c0_33 = arith.constant 0 : index
    %35 = vector.load %arg0[%c1_31, %c0_32, %c0_33] : memref<2x32x16xf32, #tpu.memory_space<vmem>>, vector<1x16x16xf32>
    %36 = vector.shape_cast %35 : vector<1x16x16xf32> to vector<16x16xf32>
    %c16_34 = arith.constant 16 : index
    %c0_35 = arith.constant 0 : index
    %37 = vector.load %arg3[%c16_34, %c0_35] : memref<40x152xf32, #tpu.memory_space<vmem>>, vector<16x16xf32>
    tpu.vector_store %arg3[%c16_34, %c0_35], %36 {strides = array<i32>} : memref<40x152xf32, #tpu.memory_space<vmem>>, vector<16x16xf32>,
    %c1_36 = arith.constant 1 : index
    %c1_37 = arith.constant 1 : index
    %c0_38 = arith.constant 0 : index
    %38 = vector.load %arg0[%c1_36, %c1_37, %c0_38] : memref<2x32x16xf32, #tpu.memory_space<vmem>>, vector<1x16x16xf32>
    %39 = vector.shape_cast %38 : vector<1x16x16xf32> to vector<16x16xf32>
    %c16_39 = arith.constant 16 : index
    %c16_40 = arith.constant 16 : index
    %40 = vector.load %arg3[%c16_39, %c16_40] : memref<40x152xf32, #tpu.memory_space<vmem>>, vector<16x16xf32>
    tpu.vector_store %arg3[%c16_39, %c16_40], %39 {strides = array<i32>} : memref<40x152xf32, #tpu.memory_space<vmem>>, vector<16x16xf32>,
    %c1_41 = arith.constant 1 : index
    %c2_42 = arith.constant 2 : index
    %c0_43 = arith.constant 0 : index
    %41 = vector.load %arg0[%c1_41, %c2_42, %c0_43] : memref<2x32x16xf32, #tpu.memory_space<vmem>>, vector<1x16x16xf32>
    %42 = vector.shape_cast %41 : vector<1x16x16xf32> to vector<16x16xf32>
    %c16_44 = arith.constant 16 : index
    %c32_45 = arith.constant 32 : index
    %43 = vector.load %arg3[%c16_44, %c32_45] : memref<40x152xf32, #tpu.memory_space<vmem>>, vector<16x16xf32>
    tpu.vector_store %arg3[%c16_44, %c32_45], %42 {strides = array<i32>} : memref<40x152xf32, #tpu.memory_space<vmem>>, vector<16x16xf32>,
    %c1_46 = arith.constant 1 : index
    %c5_47 = arith.constant 5 : index
    %c0_48 = arith.constant 0 : index
    %44 = vector.load %arg0[%c1_46, %c5_47, %c0_48] : memref<2x32x16xf32, #tpu.memory_space<vmem>>, vector<1x16x16xf32>
    %45 = vector.shape_cast %44 : vector<1x16x16xf32> to vector<16x16xf32>
    %c16_49 = arith.constant 16 : index
    %c48_50 = arith.constant 48 : index
    %46 = vector.load %arg3[%c16_49, %c48_50] : memref<40x152xf32, #tpu.memory_space<vmem>>, vector<16x16xf32>
    tpu.vector_store %arg3[%c16_49, %c48_50], %45 {strides = array<i32>} : memref<40x152xf32, #tpu.memory_space<vmem>>, vector<16x16xf32>,
    %c1_51 = arith.constant 1 : index
    %c6_52 = arith.constant 6 : index
    %c0_53 = arith.constant 0 : index
    %47 = vector.load %arg0[%c1_51, %c6_52, %c0_53] : memref<2x32x16xf32, #tpu.memory_space<vmem>>, vector<1x16x16xf32>
    %48 = vector.shape_cast %47 : vector<1x16x16xf32> to vector<16x16xf32>
    %c16_54 = arith.constant 16 : index
    %c64_55 = arith.constant 64 : index
    %49 = vector.load %arg3[%c16_54, %c64_55] : memref<40x152xf32, #tpu.memory_space<vmem>>, vector<16x16xf32>
    tpu.vector_store %arg3[%c16_54, %c64_55], %48 {strides = array<i32>} : memref<40x152xf32, #tpu.memory_space<vmem>>, vector<16x16xf32>,
    %c1_56 = arith.constant 1 : index
    %c7_57 = arith.constant 7 : index
    %c0_58 = arith.constant 0 : index
    %50 = vector.load %arg0[%c1_56, %c7_57, %c0_58] : memref<2x32x16xf32, #tpu.memory_space<vmem>>, vector<1x16x16xf32>
    %51 = vector.shape_cast %50 : vector<1x16x16xf32> to vector<16x16xf32>
    %c16_59 = arith.constant 16 : index
    %c80_60 = arith.constant 80 : index
    %52 = vector.load %arg3[%c16_59, %c80_60] : memref<40x152xf32, #tpu.memory_space<vmem>>, vector<16x16xf32>
    tpu.vector_store %arg3[%c16_59, %c80_60], %51 {strides = array<i32>} : memref<40x152xf32, #tpu.memory_space<vmem>>, vector<16x16xf32>,
    %c1_61 = arith.constant 1 : index
    %c10_62 = arith.constant 10 : index
    %c0_63 = arith.constant 0 : index
    %53 = vector.load %arg0[%c1_61, %c10_62, %c0_63] : memref<2x32x16xf32, #tpu.memory_space<vmem>>, vector<1x16x16xf32>
    %54 = vector.shape_cast %53 : vector<1x16x16xf32> to vector<16x16xf32>
    %c16_64 = arith.constant 16 : index
    %c96_65 = arith.constant 96 : index
    %55 = vector.load %arg3[%c16_64, %c96_65] : memref<40x152xf32, #tpu.memory_space<vmem>>, vector<16x16xf32>
    tpu.vector_store %arg3[%c16_64, %c96_65], %54 {strides = array<i32>} : memref<40x152xf32, #tpu.memory_space<vmem>>, vector<16x16xf32>,
    %c1_66 = arith.constant 1 : index
    %c11_67 = arith.constant 11 : index
    %c0_68 = arith.constant 0 : index
    %56 = vector.load %arg0[%c1_66, %c11_67, %c0_68] : memref<2x32x16xf32, #tpu.memory_space<vmem>>, vector<1x16x16xf32>
    %57 = vector.shape_cast %56 : vector<1x16x16xf32> to vector<16x16xf32>
    %c16_69 = arith.constant 16 : index
    %c112_70 = arith.constant 112 : index
    %58 = vector.load %arg3[%c16_69, %c112_70] : memref<40x152xf32, #tpu.memory_space<vmem>>, vector<16x16xf32>
    tpu.vector_store %arg3[%c16_69, %c112_70], %57 {strides = array<i32>} : memref<40x152xf32, #tpu.memory_space<vmem>>, vector<16x16xf32>,
    %c1_71 = arith.constant 1 : index
    %c12_72 = arith.constant 12 : index
    %c0_73 = arith.constant 0 : index
    %59 = vector.load %arg0[%c1_71, %c12_72, %c0_73] : memref<2x32x16xf32, #tpu.memory_space<vmem>>, vector<1x16x16xf32>
    %60 = vector.shape_cast %59 : vector<1x16x16xf32> to vector<16x16xf32>
    %c16_74 = arith.constant 16 : index
    %c128_75 = arith.constant 128 : index
    %61 = vector.load %arg3[%c16_74, %c128_75] : memref<40x152xf32, #tpu.memory_space<vmem>>, vector<16x16xf32>
    tpu.vector_store %arg3[%c16_74, %c128_75], %60 {strides = array<i32>} : memref<40x152xf32, #tpu.memory_space<vmem>>, vector<16x16xf32>,
    %cst_76 = arith.constant 0.000000e+00 : f32
    %62 = vector.broadcast %cst_76 : f32 to vector<1x16xf32>
    %c0_77 = arith.constant 0 : index
    %c6_78 = arith.constant 6 : index
    %c0_79 = arith.constant 0 : index
    %63 = vector.load %arg0[%c0_77, %c6_78, %c0_79] : memref<2x32x16xf32, #tpu.memory_space<vmem>>, vector<1x3x16xf32>
    %64 = vector.shape_cast %63 : vector<1x3x16xf32> to vector<3x16xf32>
    %cst_80 = arith.constant dense<0.000000e+00> : vector<16xf32>
    %65 = vector.multi_reduction <add>, %64, %cst_80 [0] : vector<3x16xf32> to vector<16xf32>
    %66 = vector.shape_cast %65 : vector<16xf32> to vector<1x16xf32>
    %67 = arith.addf %62, %66 : vector<1x16xf32>
    %c0_81 = arith.constant 0 : index
    %c11_82 = arith.constant 11 : index
    %c0_83 = arith.constant 0 : index
    %68 = vector.load %arg0[%c0_81, %c11_82, %c0_83] : memref<2x32x16xf32, #tpu.memory_space<vmem>>, vector<1x3x16xf32>
    %69 = vector.shape_cast %68 : vector<1x3x16xf32> to vector<3x16xf32>
    %cst_84 = arith.constant dense<0.000000e+00> : vector<16xf32>
    %70 = vector.multi_reduction <add>, %69, %cst_84 [0] : vector<3x16xf32> to vector<16xf32>
    %71 = vector.shape_cast %70 : vector<16xf32> to vector<1x16xf32>
    %72 = arith.addf %67, %71 : vector<1x16xf32>
    %c0_85 = arith.constant 0 : index
    %c16_86 = arith.constant 16 : index
    %c0_87 = arith.constant 0 : index
    %73 = vector.load %arg0[%c0_85, %c16_86, %c0_87] : memref<2x32x16xf32, #tpu.memory_space<vmem>>, vector<1x3x16xf32>
    %74 = vector.shape_cast %73 : vector<1x3x16xf32> to vector<3x16xf32>
    %cst_88 = arith.constant dense<0.000000e+00> : vector<16xf32>
    %75 = vector.multi_reduction <add>, %74, %cst_88 [0] : vector<3x16xf32> to vector<16xf32>
    %76 = vector.shape_cast %75 : vector<16xf32> to vector<1x16xf32>
    %77 = arith.addf %72, %76 : vector<1x16xf32>
    %cst_89 = arith.constant 0.111111112 : f32
    %78 = vector.broadcast %cst_89 : f32 to vector<1x16xf32>
    %79 = arith.mulf %77, %78 : vector<1x16xf32>
    %c32_90 = arith.constant 32 : index
    %c0_91 = arith.constant 0 : index
    %80 = vector.load %arg3[%c32_90, %c0_91] : memref<40x152xf32, #tpu.memory_space<vmem>>, vector<1x16xf32>
    tpu.vector_store %arg3[%c32_90, %c0_91], %79 {strides = array<i32>} : memref<40x152xf32, #tpu.memory_space<vmem>>, vector<1x16xf32>,
    %cst_92 = arith.constant 0.000000e+00 : f32
    %81 = vector.broadcast %cst_92 : f32 to vector<1x16xf32>
    %c1_93 = arith.constant 1 : index
    %c6_94 = arith.constant 6 : index
    %c0_95 = arith.constant 0 : index
    %82 = vector.load %arg0[%c1_93, %c6_94, %c0_95] : memref<2x32x16xf32, #tpu.memory_space<vmem>>, vector<1x3x16xf32>
    %83 = vector.shape_cast %82 : vector<1x3x16xf32> to vector<3x16xf32>
    %cst_96 = arith.constant dense<0.000000e+00> : vector<16xf32>
    %84 = vector.multi_reduction <add>, %83, %cst_96 [0] : vector<3x16xf32> to vector<16xf32>
    %85 = vector.shape_cast %84 : vector<16xf32> to vector<1x16xf32>
    %86 = arith.addf %81, %85 : vector<1x16xf32>
    %c1_97 = arith.constant 1 : index
    %c11_98 = arith.constant 11 : index
    %c0_99 = arith.constant 0 : index
    %87 = vector.load %arg0[%c1_97, %c11_98, %c0_99] : memref<2x32x16xf32, #tpu.memory_space<vmem>>, vector<1x3x16xf32>
    %88 = vector.shape_cast %87 : vector<1x3x16xf32> to vector<3x16xf32>
    %cst_100 = arith.constant dense<0.000000e+00> : vector<16xf32>
    %89 = vector.multi_reduction <add>, %88, %cst_100 [0] : vector<3x16xf32> to vector<16xf32>
    %90 = vector.shape_cast %89 : vector<16xf32> to vector<1x16xf32>
    %91 = arith.addf %86, %90 : vector<1x16xf32>
    %c1_101 = arith.constant 1 : index
    %c16_102 = arith.constant 16 : index
    %c0_103 = arith.constant 0 : index
    %92 = vector.load %arg0[%c1_101, %c16_102, %c0_103] : memref<2x32x16xf32, #tpu.memory_space<vmem>>, vector<1x3x16xf32>
    %93 = vector.shape_cast %92 : vector<1x3x16xf32> to vector<3x16xf32>
    %cst_104 = arith.constant dense<0.000000e+00> : vector<16xf32>
    %94 = vector.multi_reduction <add>, %93, %cst_104 [0] : vector<3x16xf32> to vector<16xf32>
    %95 = vector.shape_cast %94 : vector<16xf32> to vector<1x16xf32>
    %96 = arith.addf %91, %95 : vector<1x16xf32>
    %cst_105 = arith.constant 0.111111112 : f32
    %97 = vector.broadcast %cst_105 : f32 to vector<1x16xf32>
    %98 = arith.mulf %96, %97 : vector<1x16xf32>
    %c33 = arith.constant 33 : index
    %c0_106 = arith.constant 0 : index
    %99 = vector.load %arg3[%c33, %c0_106] : memref<40x152xf32, #tpu.memory_space<vmem>>, vector<1x16xf32>
    tpu.vector_store %arg3[%c33, %c0_106], %98 {strides = array<i32>} : memref<40x152xf32, #tpu.memory_space<vmem>>, vector<1x16xf32>,
    %c0_107 = arith.constant 0 : index
    %c0_108 = arith.constant 0 : index
    %100 = vector.load %arg3[%c0_107, %c0_108] : memref<40x152xf32, #tpu.memory_space<vmem>>, vector<40x152xf32>
    %c0_109 = arith.constant 0 : index
    %c0_110 = arith.constant 0 : index
    %101 = vector.load %arg1[%c0_109, %c0_110] : memref<152x128xf32, #tpu.memory_space<vmem>>, vector<152x128xf32>
    %cst_111 = arith.constant dense<0.000000e+00> : vector<40x128xf32>
    %102 = tpu.matmul %100, %101, %cst_111 {dimension_numbers = #tpu.dot_dimension_numbers<[1], [0], [0], [1], [0, 0, 1, 1], [], []>} : vector<40x152xf32>, vector<152x128xf32>, vector<40x128xf32> -> vector<40x128xf32>
    %c0_112 = arith.constant 0 : index
    %c0_113 = arith.constant 0 : index
    %103 = vector.load %arg2[%c0_112, %c0_113] : memref<40x128xf32, #tpu.memory_space<vmem>>, vector<40x128xf32>
    tpu.vector_store %arg2[%c0_112, %c0_113], %102 {strides = array<i32>} : memref<40x128xf32, #tpu.memory_space<vmem>>, vector<40x128xf32>,
    return
  }
}

</mosaic_0001>

<llo_original>
// kernel: kernel_predictor_forward.1
$region0: #{kernel_predictor_forward.1}
  #allocation0 [shape = 'u32[]', space=smem, size = 0x4, offset = 0x4, fixed_abs, tag = 'smem constant byte address 0x4 - core index']
  #allocation1 [shape = 'u32[144,128]{1,0:T(1,128)}', space=vmem, size = 0x12000, scoped, tag = 'internal scratch']
  #allocation2 [shape = 'f32[40,152]{1,0:T(8,128)}', space=vmem, size = 0xa000, scoped, tag = 'scratch operand']
  %s0 = inlined_call_operand.vmem [shape: f32[2,32,16], index: 0, kind: input, shape index: {}]
  %s1 = inlined_call_operand.vmem [shape: f32[152,128], index: 1, kind: input, shape index: {}]
  %s2 = inlined_call_operand.vmem [shape: f32[40,128], index: 2, kind: output, shape index: {}]
  %s3 = sld [smem:[#allocation0]]
  $region18: #{kernel_predictor_forward.1} parent=0
    _
  %s5 = ssub.s32 1, %s3
  %s6 = scalar_select 0, %s5, %s3
  // Predicated region
  $region2: #{kernel_predictor_forward.1} parent=0 // pred_check
    _
  $region3: #{kernel_predictor_forward.1} parent=0 // pred_check_branch
    %8 = sbr.rel (0) target = $region5
  $region4: #{kernel_predictor_forward.1} parent=0 // pred_region
    _
  $region5: #{kernel_predictor_forward.1} parent=0 // pred_fallthru
    _
  // Predicated region
  $region6: #{kernel_predictor_forward.1} parent=0 // pred_check
    _
  $region7: #{kernel_predictor_forward.1} parent=0 // pred_check_branch
    %10 = sbr.rel (0) target = $region9
  $region8: #{kernel_predictor_forward.1} parent=0 // pred_region
    _
  $region9: #{kernel_predictor_forward.1} parent=0 // pred_fallthru
    _
  %11 = vst [vmem:[#allocation2] sm:$0xff] 0.0
  %vm12 = vcmask 195584
  %13 = vst.msk [vmem:[#allocation2 + $0x8] sm:$0xff] %vm12, 0.0
  %14 = vst [vmem:[#allocation2 + $0x10] sm:$0xff] 0.0
  %15 = vst.msk [vmem:[#allocation2 + $0x18] sm:$0xff] %vm12, 0.0
  %16 = vst [vmem:[#allocation2 + $0x20] sm:$0xff] 0.0
  %17 = vst.msk [vmem:[#allocation2 + $0x28] sm:$0xff] %vm12, 0.0
  %18 = vst [vmem:[#allocation2 + $0x30] sm:$0xff] 0.0
  %19 = vst.msk [vmem:[#allocation2 + $0x38] sm:$0xff] %vm12, 0.0
  %20 = vst [vmem:[#allocation2 + $0x40] sm:$0xff] 0.0
  %21 = vst.msk [vmem:[#allocation2 + $0x48] sm:$0xff] %vm12, 0.0
  %v22 = vlaneseq
  %v23 = vand.u32 %v22, 127
  %vm24 = vcmp.eq.s32.totalorder %v23, 0
  %v25 = vsel %vm24, 1, 0
  %v26 = vcvt.s32.f32 %v25
  %28 = vrot.lane.b32.xlu0 %v26, 16
  %v29 = vpop.permute.xlu0 %28
  %vm31 = vcmask 195712
  %32 = vst.msk [vmem:[#allocation2 + $0x8] sm:$0xff] %vm31, %v29
  %33 = vst.msk [vmem:[#allocation2 + $0x18] sm:$0xff] %vm31, %v29
  %34 = vst.msk [vmem:[#allocation2 + $0x28] sm:$0xff] %vm31, %v29
  %35 = vst.msk [vmem:[#allocation2 + $0x38] sm:$0xff] %vm31, %v29
  %36 = vst.msk [vmem:[#allocation2 + $0x48] sm:$0xff] %vm31, %v29
  %v37 = vld [vmem:[%s0] sm:$0xff]
  %v38 = vld [vmem:[%s0 + $0x8] sm:$0xff]
  %vm39 = vcmask 130048
  %40 = vst.msk [vmem:[#allocation2] sm:$0xff] %vm39, %v37
  %41 = vst.msk [vmem:[#allocation2 + $0x10] sm:$0xff] %vm39, %v38
  %v42 = vld [vmem:[%s0 + $0x1] sm:$0xff]
  %v43 = vld [vmem:[%s0 + $0x9] sm:$0xff]
  %46 = vrot.lane.b32.xlu0 %v42, 16
  %v47 = vpop.permute.xlu0 %46
  %48 = vrot.lane.b32.xlu0 %v43, 16
  %v49 = vpop.permute.xlu0 %48
  %vm52 = vcmask 261248
  %53 = vst.msk [vmem:[#allocation2] sm:$0xff] %vm52, %v47
  %54 = vst.msk [vmem:[#allocation2 + $0x10] sm:$0xff] %vm52, %v49
  %v55 = vld [vmem:[%s0 + $0x2] sm:$0xff]
  %v56 = vld [vmem:[%s0 + $0xa] sm:$0xff]
  %59 = vrot.lane.b32.xlu0 %v55, 32
  %v60 = vpop.permute.xlu0 %59
  %61 = vrot.lane.b32.xlu0 %v56, 32
  %v62 = vpop.permute.xlu0 %61
  %vm65 = vcmask 392448
  %66 = vst.msk [vmem:[#allocation2] sm:$0xff] %vm65, %v60
  %67 = vst.msk [vmem:[#allocation2 + $0x10] sm:$0xff] %vm65, %v62
  %v68 = vld [vmem:[%s0 + $0x5] sm:$0xff]
  %v69 = vld [vmem:[%s0 + $0xd] sm:$0xff]
  %72 = vrot.lane.b32.xlu0 %v68, 48
  %v73 = vpop.permute.xlu0 %72
  %74 = vrot.lane.b32.xlu0 %v69, 48
  %v75 = vpop.permute.xlu0 %74
  %vm78 = vcmask 523648
  %79 = vst.msk [vmem:[#allocation2] sm:$0xff] %vm78, %v73
  %80 = vst.msk [vmem:[#allocation2 + $0x10] sm:$0xff] %vm78, %v75
  %v81 = vld [vmem:[%s0 + $0x6] sm:$0xff]
  %v82 = vld [vmem:[%s0 + $0xe] sm:$0xff]
  %85 = vrot.lane.b32.xlu0 %v81, 64
  %v86 = vpop.permute.xlu0 %85
  %87 = vrot.lane.b32.xlu0 %v82, 64
  %v88 = vpop.permute.xlu0 %87
  %vm91 = vcmask 654848
  %92 = vst.msk [vmem:[#allocation2] sm:$0xff] %vm91, %v86
  %93 = vst.msk [vmem:[#allocation2 + $0x10] sm:$0xff] %vm91, %v88
  %v94 = vld [vmem:[%s0 + $0x7] sm:$0xff]
  %v95 = vld [vmem:[%s0 + $0xf] sm:$0xff]
  %98 = vrot.lane.b32.xlu0 %v94, 80
  %v99 = vpop.permute.xlu0 %98
  %100 = vrot.lane.b32.xlu0 %v95, 80
  %v101 = vpop.permute.xlu0 %100
  %vm104 = vcmask 786048
  %105 = vst.msk [vmem:[#allocation2] sm:$0xff] %vm104, %v99
  %106 = vst.msk [vmem:[#allocation2 + $0x10] sm:$0xff] %vm104, %v101
  %v107 = vld [vmem:[%s0 + $0xa] sm:$0xff]
  %v108 = vld [vmem:[%s0 + $0x12] sm:$0xff]
  %111 = vrot.lane.b32.xlu0 %v107, 96
  %v112 = vpop.permute.xlu0 %111
  %113 = vrot.lane.b32.xlu0 %v108, 96
  %v114 = vpop.permute.xlu0 %113
  %vm117 = vcmask 917248
  %118 = vst.msk [vmem:[#allocation2] sm:$0xff] %vm117, %v112
  %119 = vst.msk [vmem:[#allocation2 + $0x10] sm:$0xff] %vm117, %v114
  %v120 = vld [vmem:[%s0 + $0xb] sm:$0xff]
  %v121 = vld [vmem:[%s0 + $0x13] sm:$0xff]
  %124 = vrot.lane.b32.xlu0 %v120, 112
  %v125 = vpop.permute.xlu0 %124
  %126 = vrot.lane.b32.xlu0 %v121, 112
  %v127 = vpop.permute.xlu0 %126
  %vm130 = vcmask 1048448
  %131 = vst.msk [vmem:[#allocation2] sm:$0xff] %vm130, %v125
  %132 = vst.msk [vmem:[#allocation2 + $0x10] sm:$0xff] %vm130, %v127
  %v133 = vld [vmem:[%s0 + $0xc] sm:$0xff]
  %v134 = vld [vmem:[%s0 + $0x14] sm:$0xff]
  %135 = vst.msk [vmem:[#allocation2 + $0x8] sm:$0xff] %vm39, %v133
  %136 = vst.msk [vmem:[#allocation2 + $0x18] sm:$0xff] %vm39, %v134
  %s137 = scalar_lea.vmem %s0, 32
  %v138 = vld [vmem:[%s137] sm:$0xff]
  %v139 = vld [vmem:[%s137 + $0x8] sm:$0xff]
  %140 = vst.msk [vmem:[#allocation2 + $0x20] sm:$0xff] %vm39, %v138
  %141 = vst.msk [vmem:[#allocation2 + $0x30] sm:$0xff] %vm39, %v139
  %v142 = vld [vmem:[%s137 + $0x1] sm:$0xff]
  %v143 = vld [vmem:[%s137 + $0x9] sm:$0xff]
  %146 = vrot.lane.b32.xlu0 %v142, 16
  %v147 = vpop.permute.xlu0 %146
  %148 = vrot.lane.b32.xlu0 %v143, 16
  %v149 = vpop.permute.xlu0 %148
  %152 = vst.msk [vmem:[#allocation2 + $0x20] sm:$0xff] %vm52, %v147
  %153 = vst.msk [vmem:[#allocation2 + $0x30] sm:$0xff] %vm52, %v149
  %v154 = vld [vmem:[%s137 + $0x2] sm:$0xff]
  %v155 = vld [vmem:[%s137 + $0xa] sm:$0xff]
  %158 = vrot.lane.b32.xlu0 %v154, 32
  %v159 = vpop.permute.xlu0 %158
  %160 = vrot.lane.b32.xlu0 %v155, 32
  %v161 = vpop.permute.xlu0 %160
  %164 = vst.msk [vmem:[#allocation2 + $0x20] sm:$0xff] %vm65, %v159
  %165 = vst.msk [vmem:[#allocation2 + $0x30] sm:$0xff] %vm65, %v161
  %v166 = vld [vmem:[%s137 + $0x5] sm:$0xff]
  %v167 = vld [vmem:[%s137 + $0xd] sm:$0xff]
  %170 = vrot.lane.b32.xlu0 %v166, 48
  %v171 = vpop.permute.xlu0 %170
  %172 = vrot.lane.b32.xlu0 %v167, 48
  %v173 = vpop.permute.xlu0 %172
  %176 = vst.msk [vmem:[#allocation2 + $0x20] sm:$0xff] %vm78, %v171
  %177 = vst.msk [vmem:[#allocation2 + $0x30] sm:$0xff] %vm78, %v173
  %v178 = vld [vmem:[%s137 + $0x6] sm:$0xff]
  %v179 = vld [vmem:[%s137 + $0xe] sm:$0xff]
  %182 = vrot.lane.b32.xlu0 %v178, 64
  %v183 = vpop.permute.xlu0 %182
  %184 = vrot.lane.b32.xlu0 %v179, 64
  %v185 = vpop.permute.xlu0 %184
  %188 = vst.msk [vmem:[#allocation2 + $0x20] sm:$0xff] %vm91, %v183
  %189 = vst.msk [vmem:[#allocation2 + $0x30] sm:$0xff] %vm91, %v185
  %v190 = vld [vmem:[%s137 + $0x7] sm:$0xff]
  %v191 = vld [vmem:[%s137 + $0xf] sm:$0xff]
  %194 = vrot.lane.b32.xlu0 %v190, 80
  %v195 = vpop.permute.xlu0 %194
  %196 = vrot.lane.b32.xlu0 %v191, 80
  %v197 = vpop.permute.xlu0 %196
  %200 = vst.msk [vmem:[#allocation2 + $0x20] sm:$0xff] %vm104, %v195
  %201 = vst.msk [vmem:[#allocation2 + $0x30] sm:$0xff] %vm104, %v197
  %v202 = vld [vmem:[%s137 + $0xa] sm:$0xff]
  %v203 = vld [vmem:[%s137 + $0x12] sm:$0xff]
  %206 = vrot.lane.b32.xlu0 %v202, 96
  %v207 = vpop.permute.xlu0 %206
  %208 = vrot.lane.b32.xlu0 %v203, 96
  %v209 = vpop.permute.xlu0 %208
  %212 = vst.msk [vmem:[#allocation2 + $0x20] sm:$0xff] %vm117, %v207
  %213 = vst.msk [vmem:[#allocation2 + $0x30] sm:$0xff] %vm117, %v209
  %v214 = vld [vmem:[%s137 + $0xb] sm:$0xff]
  %v215 = vld [vmem:[%s137 + $0x13] sm:$0xff]
  %218 = vrot.lane.b32.xlu0 %v214, 112
  %v219 = vpop.permute.xlu0 %218
  %220 = vrot.lane.b32.xlu0 %v215, 112
  %v221 = vpop.permute.xlu0 %220
  %224 = vst.msk [vmem:[#allocation2 + $0x20] sm:$0xff] %vm130, %v219
  %225 = vst.msk [vmem:[#allocation2 + $0x30] sm:$0xff] %vm130, %v221
  %v226 = vld [vmem:[%s137 + $0xc] sm:$0xff]
  %v227 = vld [vmem:[%s137 + $0x14] sm:$0xff]
  %228 = vst.msk [vmem:[#allocation2 + $0x28] sm:$0xff] %vm39, %v226
  %229 = vst.msk [vmem:[#allocation2 + $0x38] sm:$0xff] %vm39, %v227
  %v230 = vld [vmem:[%s0 + $0x6] sm:$0x7]
  %vm231 = vcmask 124928
  %v232 = vsel %vm231, %v230, 0.0
  %v233 = vrot.slane %v232, 4
  %v234 = vadd.f32 %v232, %v233
  %v235 = vrot.slane %v234, 2
  %v236 = vadd.f32 %v234, %v235
  %v237 = vrot.slane %v236, 1
  %v238 = vadd.f32 %v236, %v237
  %v239 = vadd.f32 %v238, 0.0
  %v240 = vld [vmem:[%s0 + $0xb] sm:$0x7]
  %v241 = vsel %vm231, %v240, 0.0
  %v242 = vrot.slane %v241, 4
  %v243 = vadd.f32 %v241, %v242
  %v244 = vrot.slane %v243, 2
  %v245 = vadd.f32 %v243, %v244
  %v246 = vrot.slane %v245, 1
  %v247 = vadd.f32 %v245, %v246
  %v248 = vadd.f32 %v239, %v247
  %v249 = vld [vmem:[%s0 + $0x10] sm:$0x7]
  %v250 = vsel %vm231, %v249, 0.0
  %v251 = vrot.slane %v250, 4
  %v252 = vadd.f32 %v250, %v251
  %v253 = vrot.slane %v252, 2
  %v254 = vadd.f32 %v252, %v253
  %v255 = vrot.slane %v254, 1
  %v256 = vadd.f32 %v254, %v255
  %v257 = vadd.f32 %v248, %v256
  %v258 = vmul.f32 %v257, 0.11111111
  %vm259 = vcmask 122880
  %260 = vst.msk [vmem:[#allocation2 + $0x40] sm:$0x1] %vm259, %v258
  %v261 = vld [vmem:[%s137 + $0x6] sm:$0x7]
  %v262 = vsel %vm231, %v261, 0.0
  %v263 = vrot.slane %v262, 4
  %v264 = vadd.f32 %v262, %v263
  %v265 = vrot.slane %v264, 2
  %v266 = vadd.f32 %v264, %v265
  %v267 = vrot.slane %v266, 1
  %v268 = vadd.f32 %v266, %v267
  %v269 = vadd.f32 %v268, 0.0
  %v270 = vld [vmem:[%s137 + $0xb] sm:$0x7]
  %v271 = vsel %vm231, %v270, 0.0
  %v272 = vrot.slane %v271, 4
  %v273 = vadd.f32 %v271, %v272
  %v274 = vrot.slane %v273, 2
  %v275 = vadd.f32 %v273, %v274
  %v276 = vrot.slane %v275, 1
  %v277 = vadd.f32 %v275, %v276
  %v278 = vadd.f32 %v269, %v277
  %v279 = vld [vmem:[%s137 + $0x10] sm:$0x7]
  %v280 = vsel %vm231, %v279, 0.0
  %v281 = vrot.slane %v280, 4
  %v282 = vadd.f32 %v280, %v281
  %v283 = vrot.slane %v282, 2
  %v284 = vadd.f32 %v282, %v283
  %v285 = vrot.slane %v284, 1
  %v286 = vadd.f32 %v284, %v285
  %v287 = vadd.f32 %v278, %v286
  %v288 = vmul.f32 %v287, 0.11111111
  %289 = vst.msk [vmem:[#allocation2 + $0x41] sm:$0x1] %vm259, %v288
  %v290 = vld [vmem:[#allocation2] sm:$0xff]
  %v291 = vld [vmem:[#allocation2 + $0x8] sm:$0xff]
  %v292 = vld [vmem:[#allocation2 + $0x10] sm:$0xff]
  %v293 = vld [vmem:[#allocation2 + $0x18] sm:$0xff]
  %v294 = vld [vmem:[#allocation2 + $0x20] sm:$0xff]
  %v295 = vld [vmem:[#allocation2 + $0x28] sm:$0xff]
  %v296 = vld [vmem:[#allocation2 + $0x30] sm:$0xff]
  %v297 = vld [vmem:[#allocation2 + $0x38] sm:$0xff]
  %v298 = vld [vmem:[#allocation2 + $0x40] sm:$0xff]
  %v299 = vld [vmem:[#allocation2 + $0x48] sm:$0xff]
  %v300 = vld [vmem:[%s1] sm:$0xff]
  %v301 = vld [vmem:[%s1 + $0x8] sm:$0xff]
  %v302 = vld [vmem:[%s1 + $0x10] sm:$0xff]
  %v303 = vld [vmem:[%s1 + $0x18] sm:$0xff]
  %v304 = vld [vmem:[%s1 + $0x20] sm:$0xff]
  %v305 = vld [vmem:[%s1 + $0x28] sm:$0xff]
  %v306 = vld [vmem:[%s1 + $0x30] sm:$0xff]
  %v307 = vld [vmem:[%s1 + $0x38] sm:$0xff]
  %v308 = vld [vmem:[%s1 + $0x40] sm:$0xff]
  %v309 = vld [vmem:[%s1 + $0x48] sm:$0xff]
  %v310 = vld [vmem:[%s1 + $0x50] sm:$0xff]
  %v311 = vld [vmem:[%s1 + $0x58] sm:$0xff]
  %v312 = vld [vmem:[%s1 + $0x60] sm:$0xff]
  %v313 = vld [vmem:[%s1 + $0x68] sm:$0xff]
  %v314 = vld [vmem:[%s1 + $0x70] sm:$0xff]
  %v315 = vld [vmem:[%s1 + $0x78] sm:$0xff]
  %v316 = vld [vmem:[%s1 + $0x80] sm:$0xff]
  %v317 = vld [vmem:[%s1 + $0x88] sm:$0xff]
  %v318 = vld [vmem:[%s1 + $0x90] sm:$0xff]
  %v320 = vsel %vm12, %v291, 0
  %v323 = vsel %vm12, %v293, 0
  %v326 = vsel %vm12, %v295, 0
  %v329 = vsel %vm12, %v297, 0
  %v332 = vsel %vm12, %v299, 0
  %334 = vmatprep.subr.mxu0 0.0
  %335 = vmatpush1.msra.mxu0 %v300
  %336 = vmatprep.subr.mxu0 0.0
  %337 = vmatpush1.msra.mxu0 %v301
  %338 = vmatprep.subr.mxu0 0.0
  %339 = vmatpush1.msra.mxu0 %v302
  %340 = vmatprep.subr.mxu0 0.0
  %341 = vmatpush1.msra.mxu0 %v303
  %342 = vmatprep.subr.mxu0 0.0
  %343 = vmatpush1.msra.mxu0 %v304
  %344 = vmatprep.subr.mxu0 0.0
  %345 = vmatpush1.msra.mxu0 %v305
  %346 = vmatprep.subr.mxu0 0.0
  %347 = vmatpush1.msra.mxu0 %v306
  %348 = vmatprep.subr.mxu0 0.0
  %349 = vmatpush1.msra.mxu0 %v307
  %350 = vmatprep.subr.mxu0 0.0
  %351 = vmatpush1.msra.mxu0 %v308
  %352 = vmatprep.subr.mxu0 0.0
  %353 = vmatpush1.msra.mxu0 %v309
  %354 = vmatprep.subr.mxu0 0.0
  %355 = vmatpush1.msra.mxu0 %v310
  %356 = vmatprep.subr.mxu0 0.0
  %357 = vmatpush1.msra.mxu0 %v311
  %358 = vmatprep.subr.mxu0 0.0
  %359 = vmatpush1.msra.mxu0 %v312
  %360 = vmatprep.subr.mxu0 0.0
  %361 = vmatpush1.msra.mxu0 %v313
  %362 = vmatprep.subr.mxu0 0.0
  %363 = vmatpush1.msra.mxu0 %v314
  %364 = vmatprep.subr.mxu0 0.0
  %365 = vmatpush1.msra.mxu0 %v315
  %366 = vmatprep.subr.mxu0 0.0
  %367 = vmatpush1.msra.mxu0 %v316
  %368 = vmatprep.subr.mxu0 0.0
  %369 = vmatpush1.msra.mxu0 %v317
  %370 = vmatprep.subr.mxu0 0.0
  %371 = vmatpush1.msra.mxu0 %v318
  %372 = vmatprep.subr.mxu0 0.0
  %373 = vmatpush1.msra.mxu0 0.0
  %374 = vmatprep.subr.mxu0 0.0
  %375 = vmatpush1.msra.mxu0 0.0
  %376 = vmatprep.subr.mxu0 0.0
  %377 = vmatpush1.msra.mxu0 0.0
  %378 = vmatprep.subr.mxu0 0.0
  %379 = vmatpush1.msra.mxu0 0.0
  %380 = vmatprep.subr.mxu0 0.0
  %381 = vmatpush1.msra.mxu0 0.0
  %382 = vmatprep.subr.mxu0 0.0
  %383 = vmatpush1.msra.mxu0 0.0
  %384 = vmatprep.subr.mxu0 0.0
  %385 = vmatpush1.msra.mxu0 0.0
  %386 = vmatprep.subr.mxu0 0.0
  %387 = vmatpush1.msra.mxu0 0.0
  %388 = vmatprep.subr.mxu0 0.0
  %389 = vmatpush1.msra.mxu0 0.0
  %390 = vmatprep.subr.mxu0 0.0
  %391 = vmatpush1.msra.mxu0 0.0
  %392 = vmatprep.subr.mxu0 0.0
  %393 = vmatpush1.msra.mxu0 0.0
  %394 = vmatprep.subr.mxu0 0.0
  %395 = vmatpush1.msra.mxu0 0.0
  %396 = vmatprep.subr.mxu0 0.0
  %397 = vmatpush1.msra.mxu0 0.0
  %398 = vmatprep.mubr.f32.mxu0 %v320
  %399 = vmatmul.mubr.f32.gmra.mrb[0].mxu0 %v290
  %v400 = vpop.f32.mrb[0].mxu0
  %v401 = vadd.f32 0.0, %v400
  %v402 = vpop.f32.mrb[0].mxu0
  %403 = vmatprep.mubr.f32.mxu0 %v323
  %404 = vmatmul.mubr.f32.gmra.mrb[0].mxu0 %v292
  %v405 = vpop.f32.mrb[0].mxu0
  %v406 = vadd.f32 0.0, %v405
  %v407 = vpop.f32.mrb[0].mxu0
  %408 = vmatprep.mubr.f32.mxu0 %v326
  %409 = vmatmul.mubr.f32.gmra.mrb[0].mxu0 %v294
  %v410 = vpop.f32.mrb[0].mxu0
  %v411 = vadd.f32 0.0, %v410
  %v412 = vpop.f32.mrb[0].mxu0
  %413 = vmatprep.mubr.f32.mxu0 %v329
  %414 = vmatmul.mubr.f32.gmra.mrb[0].mxu0 %v296
  %v415 = vpop.f32.mrb[0].mxu0
  %v416 = vadd.f32 0.0, %v415
  %v417 = vpop.f32.mrb[0].mxu0
  %418 = vmatprep.mubr.f32.mxu0 %v332
  %419 = vmatmul.mubr.f32.gmra.mrb[0].mxu0 %v298
  %v420 = vpop.f32.mrb[0].mxu0
  %v421 = vadd.f32 0.0, %v420
  %v422 = vpop.f32.mrb[0].mxu0
  %423 = vdwg.mxu0
  %424 = vst [vmem:[%s2] sm:$0xff] %v401
  %425 = vst [vmem:[%s2 + $0x8] sm:$0xff] %v406
  %426 = vst [vmem:[%s2 + $0x10] sm:$0xff] %v411
  %427 = vst [vmem:[%s2 + $0x18] sm:$0xff] %v416
  %428 = vst [vmem:[%s2 + $0x20] sm:$0xff] %v421
  // Predicated region
  $region10: #{kernel_predictor_forward.1} parent=0 // pred_check
    _
  $region11: #{kernel_predictor_forward.1} parent=0 // pred_check_branch
    %430 = sbr.rel (0) target = $region13
  $region12: #{kernel_predictor_forward.1} parent=0 // pred_region
    _
  $region13: #{kernel_predictor_forward.1} parent=0 // pred_fallthru
    _
  // Predicated region
  $region14: #{kernel_predictor_forward.1} parent=0 // pred_check
    _
  $region15: #{kernel_predictor_forward.1} parent=0 // pred_check_branch
    %432 = sbr.rel (0) target = $region17
  $region16: #{kernel_predictor_forward.1} parent=0 // pred_region
    _
  $region17: #{kernel_predictor_forward.1} parent=0 // pred_fallthru
    _

</llo_original>
